<compile_context>
chip_gen: v5e
topology: v5e:2x2
jax: 0.10.0
libtpu: 0.0.40
codegen_flags: <defaults>
</compile_context>

<pallas_src>
import functools

import jax
import jax.numpy as jnp
from jax.experimental import pallas as pl
from jax.experimental.pallas import tpu as pltpu

_LANE = 128


def _round_up(n, m):
    return (n + m - 1) // m * m


def _sublane_multiple(dtype):
    # 8 sublanes for 32-bit, 16 for bf16, 32 for int8/fp8 compute dtypes.
    return max(8, 32 // jnp.dtype(dtype).itemsize)


def _sigmoid_via_tanh(x):
    # One EUP op (tanh) instead of exp + reciprocal.
    return 0.5 * (jnp.tanh(0.5 * x) + 1.0)


def _vmem_capacity_bytes():
    try:
        return int(pltpu.get_tpu_info().vmem_capacity_bytes)
    except Exception:
        return 128 * 1024 * 1024  # conservative fallback (v5e/v6e physical)


def _lstm_chunk_kernel(x_ref, h0_ref, c0_ref, wih_ref, whh_ref, b_ref,
                       hseq_ref, hfin_ref, cfin_ref,
                       pg_sc, h_sc, c_sc, *, t_actual, t_chunk):
    """One grid step == one (batch-tile, time-chunk) of Tc LSTM steps.

    x_ref    : (Tc, Bt, INp)    time chunk of inputs (compute dtype)
    h0 / c0  : (Bt, Hp) f32     initial state (consumed at chunk 0)
    wih_ref  : (INp, 4Hp)       input-projection weights, VMEM resident
    whh_ref  : (Hp, 4Hp)        recurrent weights, VMEM resident
    b_ref    : (1, 4Hp) f32     fused bias
    hseq_ref : (Tc, Bt, Hp)     per-step hidden outputs (compute dtype)
    hfin/cfin: (Bt, Hp) f32     final state (aliased with h0/c0)
    pg_sc    : (Tc, Bt, 4Hp) f32  chunk-wide pre-gates scratch
    h_sc/c_sc: (Bt, Hp) f32     recurrent state, persists across time chunks
    """
    tc_idx = pl.program_id(1)                      # time-chunk index
    t_c, b_t, _ = x_ref.shape
    hp = h_sc.shape[-1]
    cdt = wih_ref.dtype

    @pl.when(tc_idx == 0)
    def _init():
        h_sc[...] = h0_ref[...].astype(jnp.float32)
        c_sc[...] = c0_ref[...].astype(jnp.float32)

    # ---- off-the-serial-path input projection: ONE matmul, M = Tc*Bt ----
    x_flat = x_ref[...].reshape(t_c * b_t, x_ref.shape[-1])
    pg = jnp.dot(x_flat, wih_ref[...], preferred_element_type=jnp.float32)
    pg_sc[...] = (pg + b_ref[...]).reshape(t_c, b_t, 4 * hp)

    needs_mask = (t_actual % t_chunk) != 0          # trace-time constant

    # ---- serial recurrence: only h @ W_hh (K = Hp) per step ----
    # TODO(synk): for very large Hp (>=1024) chunk the gate/state epilogue
    # over the lane dimension to bound live vregs.
    def step(s, carry):
        h, c = carry
        gates = pg_sc[s] + jnp.dot(h.astype(cdt), whh_ref[...],
                                   preferred_element_type=jnp.float32)
        i_g = _sigmoid_via_tanh(gates[:, 0 * hp:1 * hp])
        f_g = _sigmoid_via_tanh(gates[:, 1 * hp:2 * hp])
        g_g = jnp.tanh(gates[:, 2 * hp:3 * hp])
        o_g = _sigmoid_via_tanh(gates[:, 3 * hp:4 * hp])
        c_new = f_g * c + i_g * g_g
        h_new = o_g * jnp.tanh(c_new)
        hseq_ref[s] = h_new.astype(hseq_ref.dtype)
        if needs_mask:                              # only when T % Tc != 0
            valid = (tc_idx * t_chunk + s) < t_actual
            h_new = jnp.where(valid, h_new, h)
            c_new = jnp.where(valid, c_new, c)
        return h_new, c_new

    h_fin, c_fin = jax.lax.fori_loop(0, t_c, step, (h_sc[...], c_sc[...]),
                                     unroll=True)
    h_sc[...] = h_fin
    c_sc[...] = c_fin

    # Keep the constant-index final-state blocks always initialized (cheap),
    # so writeback at batch-tile change / grid end is always valid.
    hfin_ref[...] = h_fin.astype(hfin_ref.dtype)
    cfin_ref[...] = c_fin.astype(cfin_ref.dtype)


@functools.partial(jax.jit, static_argnums=(6,))
def _lstm_forward_sequence(x_seq, h_p, c_p, w_ih_p, w_hh_p, bias_p, out_size):
    """x_seq: [T, B, in] (unpadded). Padded state/weights. One pallas_call."""
    T, B, in_size = x_seq.shape
    INp, G4 = w_ih_p.shape
    Hp = G4 // 4
    Bp = h_p.shape[0]
    cdt = w_ih_p.dtype
    csz = jnp.dtype(cdt).itemsize

    # Batch tiling ("parallel" axis → v7x megacore for large batches).
    Bt = Bp if Bp <= 128 else 128
    NB = Bp // Bt

    # Time chunking: amortize per-grid-step overhead, keep scratch bounded.
    per_step_bytes = Bt * (G4 * 4 + INp * csz + Hp * csz)
    Tc = max(1, min(16, T, (4 * 1024 * 1024) // max(per_step_bytes, 1)))
    NT = -(-T // Tc)
    T_pad = NT * Tc

    # Pad x inside jit so the padding fuses with surrounding XLA ops.
    x_p = jnp.zeros((T_pad, Bp, INp), cdt)
    x_p = x_p.at[:T, :B, :in_size].set(x_seq.astype(cdt))

    # Advisory cost estimate.
    flops = int(2 * T_pad * Bp * (INp + Hp) * G4)
    transcendentals = int(5 * T_pad * Bp * Hp)
    bytes_accessed = int(
        T_pad * Bp * INp * csz            # x
        + (INp + Hp) * G4 * csz           # weights
        + G4 * 4                          # bias
        + 4 * Bp * Hp * 4                 # h0/c0/hfin/cfin
        + T_pad * Bp * Hp * csz)          # h sequence

    # VMEM footprint (default double buffering on pipelined blocks).
    vmem_need = (
        2 * Tc * Bt * INp * csz           # x chunk
        + 2 * Tc * Bt * Hp * csz          # h_seq chunk
        + 2 * (INp + Hp) * G4 * csz       # resident weights
        + 2 * G4 * 4                      # bias
        + 8 * Bt * Hp * 4                 # h0/c0/hfin/cfin blocks
        + Tc * Bt * G4 * 4                # pre-gates scratch
        + 2 * Bt * Hp * 4)                # h/c state scratch
    compiler_kwargs = {"dimension_semantics": ("parallel", "arbitrary")}
    if vmem_need > 8 * 1024 * 1024:
        cap = (_vmem_capacity_bytes() * 3) // 4   # ~96 MiB v5e/v6e, ~48 MiB v7x
        compiler_kwargs["vmem_limit_bytes"] = int(min(vmem_need * 5 // 4, cap))

    kernel = functools.partial(_lstm_chunk_kernel, t_actual=T, t_chunk=Tc)

    # TODO(synk): once pipeline_mode=pl.Buffered(1) is reliable for
    # constant-index blocks, apply it to W_ih/W_hh/bias/h0/c0 to halve their
    # resident VMEM footprint (matters for v7x's 64 MiB VMEM at large H).
    grid_spec = pltpu.PrefetchScalarGridSpec(
        num_scalar_prefetch=0,
        grid=(NB, NT),
        in_specs=[
            pl.BlockSpec((Tc, Bt, INp), lambda b, t: (t, b, 0)),   # x chunk
            pl.BlockSpec((Bt, Hp), lambda b, t: (b, 0)),           # h0
            pl.BlockSpec((Bt, Hp), lambda b, t: (b, 0)),           # c0
            pl.BlockSpec((INp, G4), lambda b, t: (0, 0)),          # W_ih
            pl.BlockSpec((Hp, G4), lambda b, t: (0, 0)),           # W_hh
            pl.BlockSpec((1, G4), lambda b, t: (0, 0)),            # bias
        ],
        out_specs=(
            pl.BlockSpec((Tc, Bt, Hp), lambda b, t: (t, b, 0)),    # h sequence
            pl.BlockSpec((Bt, Hp), lambda b, t: (b, 0)),           # h final
            pl.BlockSpec((Bt, Hp), lambda b, t: (b, 0)),           # c final
        ),
        scratch_shapes=[
            pltpu.VMEM((Tc, Bt, G4), jnp.float32),   # chunk pre-gates
            pltpu.VMEM((Bt, Hp), jnp.float32),       # h state
            pltpu.VMEM((Bt, Hp), jnp.float32),       # c state (always f32)
        ],
    )

    h_seq_p, h_fin_p, c_fin_p = pl.pallas_call(
        kernel,
        grid_spec=grid_spec,
        out_shape=(jax.ShapeDtypeStruct((T_pad, Bp, Hp), cdt),
                   jax.ShapeDtypeStruct((Bp, Hp), jnp.float32),
                   jax.ShapeDtypeStruct((Bp, Hp), jnp.float32)),
        input_output_aliases={1: 1, 2: 2},         # h0 -> h_final, c0 -> c_final
        compiler_params=pltpu.CompilerParams(**compiler_kwargs),
        cost_estimate=pl.CostEstimate(flops=flops,
                                      transcendentals=transcendentals,
                                      bytes_accessed=bytes_accessed),
    )(x_p, h_p, c_p, w_ih_p, w_hh_p, bias_p)

    h_seq = h_seq_p[:T, :B, :out_size].astype(x_seq.dtype)
    return h_seq, h_fin_p, c_fin_p


def _pad_gate_cols(w, H, Hp):
    """[K, 4H] -> [K, 4Hp]: each gate's H columns placed at g*Hp, rest zero."""
    K = w.shape[0]
    out = jnp.zeros((K, 4 * Hp), dtype=w.dtype)
    for g in range(4):
        out = out.at[:, g * Hp:g * Hp + H].set(w[:, g * H:(g + 1) * H])
    return out


class StatefulLSTM:
    """JAX/Pallas port of the PyTorch StatefulLSTM module.

    forward(x) keeps the original one-step-per-call semantics; use
    forward_sequence(x_seq) with x_seq = [T, B, in] to amortize launch and
    weight-DMA cost over the whole sequence in a single pallas_call.
    Weights/compute default to bf16 (f32 accumulation, f32 h/c state); pass
    compute_dtype=jnp.float32 for bit-accurate parity with an f32 reference.
    """

    def __init__(self, in_size, out_size, key, dtype=jnp.float32,
                 compute_dtype=jnp.bfloat16):
        self.in_size = in_size
        self.out_size = out_size
        self.compute_dtype = compute_dtype

        k1, k2, k3, k4 = jax.random.split(key, 4)
        bound = 1.0 / (out_size ** 0.5)       # PyTorch LSTMCell init
        # Unpadded reference params (transposed vs. PyTorch): [in,4H], [H,4H].
        self.w_ih = jax.random.uniform(k1, (in_size, 4 * out_size),
                                       minval=-bound, maxval=bound, dtype=dtype)
        self.w_hh = jax.random.uniform(k2, (out_size, 4 * out_size),
                                       minval=-bound, maxval=bound, dtype=dtype)
        b_ih = jax.random.uniform(k3, (4 * out_size,),
                                  minval=-bound, maxval=bound, dtype=dtype)
        b_hh = jax.random.uniform(k4, (4 * out_size,),
                                  minval=-bound, maxval=bound, dtype=dtype)
        self.bias = (b_ih + b_hh).reshape(1, 4 * out_size)

        # Padded kernel-side params (split: W_ih and W_hh stay separate so the
        # x projection can run off the serial path).  Padded rows/cols are
        # zero so padded lanes of h/c stay exactly 0 through the recurrence.
        INp = _round_up(in_size, _LANE)
        Hp = _round_up(out_size, _LANE)
        self._INp, self._Hp = INp, Hp
        self._w_ih_p = jnp.zeros((INp, 4 * Hp), compute_dtype).at[:in_size].set(
            _pad_gate_cols(self.w_ih, out_size, Hp).astype(compute_dtype))
        self._w_hh_p = jnp.zeros((Hp, 4 * Hp), compute_dtype).at[:out_size].set(
            _pad_gate_cols(self.w_hh, out_size, Hp).astype(compute_dtype))
        self._bias_p = _pad_gate_cols(self.bias, out_size, Hp).astype(jnp.float32)

        self._h_p = None
        self._c_p = None
        self._batch = None

    # ---- stateful API (matches the PyTorch module) ----
    def reset_state(self):
        self._h_p = None
        self._c_p = None
        self._batch = None

    @property
    def h(self):
        if self._h_p is None:
            return None
        return self._h_p[:self._batch, :self.out_size]

    @property
    def c(self):
        if self._c_p is None:
            return None
        return self._c_p[:self._batch, :self.out_size]

    def _padded_batch(self, B):
        sub = _sublane_multiple(self.compute_dtype)
        Bp = _round_up(max(B, sub), sub)
        if Bp > 128:                       # batch-tile axis uses 128-row tiles
            Bp = _round_up(Bp, 128)
        return Bp

    def forward(self, x):
        """x: [B, in_size] -> h: [B, out_size] (one step, state carried)."""
        return self.forward_sequence(x[None])[0]

    __call__ = forward

    def forward_sequence(self, x_seq):
        """x_seq: [T, B, in_size] -> [T, B, out_size]; one pallas_call total."""
        _, B, _ = x_seq.shape
        if self._h_p is None:
            Bp = self._padded_batch(B)
            self._batch = B
            self._h_p = jnp.zeros((Bp, self._Hp), jnp.float32)
            self._c_p = jnp.zeros((Bp, self._Hp), jnp.float32)

        h_seq, self._h_p, self._c_p = _lstm_forward_sequence(
            x_seq, self._h_p, self._c_p,
            self._w_ih_p, self._w_hh_p, self._bias_p, self.out_size)
        return h_seq


# ------------------------- reference + self-test -------------------------
def _lstm_ref_scan(xs, w_ih, w_hh, bias):
    H = w_hh.shape[0]

    def step(carry, x):
        h, c = carry
        gates = x @ w_ih + h @ w_hh + bias
        i = jax.nn.sigmoid(gates[:, 0 * H:1 * H])
        f = jax.nn.sigmoid(gates[:, 1 * H:2 * H])
        g = jnp.tanh(gates[:, 2 * H:3 * H])
        o = jax.nn.sigmoid(gates[:, 3 * H:4 * H])
        c = f * c + i * g
        h = o * jnp.tanh(c)
        return (h, c), h

    h0 = jnp.zeros((xs.shape[1], H), xs.dtype)
    c0 = jnp.zeros_like(h0)
    (h_fin, c_fin), hs = jax.lax.scan(step, (h0, c0), xs)
    return hs, h_fin, c_fin


if __name__ == "__main__":
    key = jax.random.PRNGKey(0)
    k_param, k_x = jax.random.split(key)

    batch, in_size, hidden, T = 4, 32, 32, 6
    xs = jax.random.normal(k_x, (T, batch, in_size), dtype=jnp.float32)

    # ---------- f32 compute path: strict numerical check ----------
    model = StatefulLSTM(in_size, hidden, k_param, compute_dtype=jnp.float32)

    # Path 1: step-by-step (original PyTorch stateful semantics).
    step_outs = [model(xs[t]) for t in range(T)]
    h_steps = jnp.stack(step_outs)
    jax.block_until_ready(h_steps)
    h_fin_steps, c_fin_steps = model.h, model.c

    # Path 2: whole sequence in one pallas_call (chunked time grid).
    model.reset_state()
    h_seq = model.forward_sequence(xs)
    jax.block_until_ready(h_seq)

    hs_ref, h_ref, c_ref = _lstm_ref_scan(xs, model.w_ih, model.w_hh, model.bias)

    assert jnp.allclose(h_steps, hs_ref, atol=1e-4), "step-by-step h mismatch"
    assert jnp.allclose(h_fin_steps, h_ref, atol=1e-4), "step-by-step final h mismatch"
    assert jnp.allclose(c_fin_steps, c_ref, atol=1e-4), "step-by-step final c mismatch"
    assert jnp.allclose(h_seq, hs_ref, atol=1e-4), "sequence h mismatch"
    assert jnp.allclose(model.h, h_ref, atol=1e-4), "sequence final h mismatch"
    assert jnp.allclose(model.c, c_ref, atol=1e-4), "sequence final c mismatch"

    # ---------- default bf16 weights: loose check ----------
    model_bf16 = StatefulLSTM(in_size, hidden, k_param)   # compute_dtype=bf16
    h_seq_bf16 = model_bf16.forward_sequence(xs)
    jax.block_until_ready(h_seq_bf16)
    hs_ref2, h_ref2, c_ref2 = _lstm_ref_scan(
        xs, model_bf16.w_ih, model_bf16.w_hh, model_bf16.bias)
    assert jnp.allclose(h_seq_bf16, hs_ref2, atol=5e-2), "bf16 sequence h mismatch"
    assert jnp.allclose(model_bf16.h, h_ref2, atol=5e-2), "bf16 final h mismatch"
    assert jnp.allclose(model_bf16.c, c_ref2, atol=5e-2), "bf16 final c mismatch"

    print("KERNEL_OK")
</pallas_src>

<mosaic_0001>
module attributes {stable_mosaic.version = 11 : i64} {
  func.func @_lstm_chunk_kernel(%arg0: i32, %arg1: i32, %arg2: memref<1x8x128xf32, #tpu.memory_space<vmem>>, %arg3: memref<8x128xf32, #tpu.memory_space<vmem>>, %arg4: memref<8x128xf32, #tpu.memory_space<vmem>>, %arg5: memref<128x512xf32, #tpu.memory_space<vmem>>, %arg6: memref<128x512xf32, #tpu.memory_space<vmem>>, %arg7: memref<1x512xf32, #tpu.memory_space<vmem>>, %arg8: memref<1x8x128xf32, #tpu.memory_space<vmem>>, %arg9: memref<8x128xf32, #tpu.memory_space<vmem>>, %arg10: memref<8x128xf32, #tpu.memory_space<vmem>>, %arg11: memref<1x8x512xf32, #tpu.memory_space<vmem>>, %arg12: memref<8x128xf32, #tpu.memory_space<vmem>>, %arg13: memref<8x128xf32, #tpu.memory_space<vmem>>) attributes {dimension_semantics = [#tpu.dimension_semantics<parallel>, #tpu.dimension_semantics<arbitrary>], iteration_bounds = array<i64: 1, 1>, scalar_prefetch = 0 : i64, scratch_operands = 3 : i64, tpu.core_type = #tpu.core_type<tc>, window_params = [{transform_indices = @transform_0, window_bounds = array<i64: 1, 8, 128>}, {transform_indices = @transform_1, window_bounds = array<i64: 8, 128>}, {transform_indices = @transform_2, window_bounds = array<i64: 8, 128>}, {pipeline_mode = #tpu.pipeline_mode<synchronous>, transform_indices = @transform_3, window_bounds = array<i64: 128, 512>}, {pipeline_mode = #tpu.pipeline_mode<synchronous>, transform_indices = @transform_4, window_bounds = array<i64: 128, 512>}, {pipeline_mode = #tpu.pipeline_mode<synchronous>, transform_indices = @transform_5, window_bounds = array<i64: 1, 512>}, {transform_indices = @transform_6, window_bounds = array<i64: 1, 8, 128>}, {transform_indices = @transform_7, window_bounds = array<i64: 8, 128>}, {transform_indices = @transform_8, window_bounds = array<i64: 8, 128>}]} {
    %c0_i32 = arith.constant 0 : i32
    %0 = arith.cmpi eq, %arg1, %c0_i32 : i32
    %1 = arith.extui %0 : i1 to i32
    %c0_i32_0 = arith.constant 0 : i32
    %2 = arith.cmpi ne, %1, %c0_i32_0 : i32
    scf.if %2 {
      %c0_39 = arith.constant 0 : index
      %c0_40 = arith.constant 0 : index
      %59 = vector.load %arg3[%c0_39, %c0_40] : memref<8x128xf32, #tpu.memory_space<vmem>>, vector<8x128xf32>
      %c0_41 = arith.constant 0 : index
      %c0_42 = arith.constant 0 : index
      %60 = vector.load %arg12[%c0_41, %c0_42] : memref<8x128xf32, #tpu.memory_space<vmem>>, vector<8x128xf32>
      tpu.vector_store %arg12[%c0_41, %c0_42], %59 {strides = array<i32>} : memref<8x128xf32, #tpu.memory_space<vmem>>, vector<8x128xf32>,
      %c0_43 = arith.constant 0 : index
      %c0_44 = arith.constant 0 : index
      %61 = vector.load %arg4[%c0_43, %c0_44] : memref<8x128xf32, #tpu.memory_space<vmem>>, vector<8x128xf32>
      %c0_45 = arith.constant 0 : index
      %c0_46 = arith.constant 0 : index
      %62 = vector.load %arg13[%c0_45, %c0_46] : memref<8x128xf32, #tpu.memory_space<vmem>>, vector<8x128xf32>
      tpu.vector_store %arg13[%c0_45, %c0_46], %61 {strides = array<i32>} : memref<8x128xf32, #tpu.memory_space<vmem>>, vector<8x128xf32>,
    } else {
    }
    %c0 = arith.constant 0 : index
    %c0_1 = arith.constant 0 : index
    %c0_2 = arith.constant 0 : index
    %3 = vector.load %arg2[%c0, %c0_1, %c0_2] : memref<1x8x128xf32, #tpu.memory_space<vmem>>, vector<1x8x128xf32>
    %4 = vector.shape_cast %3 : vector<1x8x128xf32> to vector<8x128xf32>
    %c0_3 = arith.constant 0 : index
    %c0_4 = arith.constant 0 : index
    %5 = vector.load %arg5[%c0_3, %c0_4] : memref<128x512xf32, #tpu.memory_space<vmem>>, vector<128x512xf32>
    %cst = arith.constant dense<0.000000e+00> : vector<8x512xf32>
    %6 = tpu.matmul %4, %5, %cst {dimension_numbers = #tpu.dot_dimension_numbers<[1], [0], [0], [1], [0, 0, 1, 1], [], []>} : vector<8x128xf32>, vector<128x512xf32>, vector<8x512xf32> -> vector<8x512xf32>
    %c0_5 = arith.constant 0 : index
    %c0_6 = arith.constant 0 : index
    %7 = vector.load %arg7[%c0_5, %c0_6] : memref<1x512xf32, #tpu.memory_space<vmem>>, vector<1x512xf32>
    %8 = vector.broadcast %7 : vector<1x512xf32> to vector<8x512xf32>
    %9 = arith.addf %6, %8 : vector<8x512xf32>
    %10 = vector.shape_cast %9 : vector<8x512xf32> to vector<1x8x512xf32>
    %c0_7 = arith.constant 0 : index
    %c0_8 = arith.constant 0 : index
    %c0_9 = arith.constant 0 : index
    %11 = vector.load %arg11[%c0_7, %c0_8, %c0_9] : memref<1x8x512xf32, #tpu.memory_space<vmem>>, vector<1x8x512xf32>
    tpu.vector_store %arg11[%c0_7, %c0_8, %c0_9], %10 {strides = array<i32>} : memref<1x8x512xf32, #tpu.memory_space<vmem>>, vector<1x8x512xf32>,
    %c0_10 = arith.constant 0 : index
    %c0_11 = arith.constant 0 : index
    %12 = vector.load %arg12[%c0_10, %c0_11] : memref<8x128xf32, #tpu.memory_space<vmem>>, vector<8x128xf32>
    %c0_12 = arith.constant 0 : index
    %c0_13 = arith.constant 0 : index
    %13 = vector.load %arg13[%c0_12, %c0_13] : memref<8x128xf32, #tpu.memory_space<vmem>>, vector<8x128xf32>
    %c0_i32_14 = arith.constant 0 : i32
    %14 = arith.index_cast %c0_i32_14 : i32 to index
    %c0_15 = arith.constant 0 : index
    %c0_16 = arith.constant 0 : index
    %15 = vector.load %arg11[%14, %c0_15, %c0_16] : memref<1x8x512xf32, #tpu.memory_space<vmem>>, vector<1x8x512xf32>
    %16 = vector.shape_cast %15 : vector<1x8x512xf32> to vector<8x512xf32>
    %c0_17 = arith.constant 0 : index
    %c0_18 = arith.constant 0 : index
    %17 = vector.load %arg6[%c0_17, %c0_18] : memref<128x512xf32, #tpu.memory_space<vmem>>, vector<128x512xf32>
    %cst_19 = arith.constant dense<0.000000e+00> : vector<8x512xf32>
    %18 = tpu.matmul %12, %17, %cst_19 {dimension_numbers = #tpu.dot_dimension_numbers<[1], [0], [0], [1], [0, 0, 1, 1], [], []>} : vector<8x128xf32>, vector<128x512xf32>, vector<8x512xf32> -> vector<8x512xf32>
    %19 = arith.addf %16, %18 : vector<8x512xf32>
    %20 = vector.extract_strided_slice %19 {offsets = [0, 0], sizes = [8, 128], strides = [1, 1]} : vector<8x512xf32> to vector<8x128xf32>
    %cst_20 = arith.constant 5.000000e-01 : f32
    %21 = vector.broadcast %cst_20 : f32 to vector<8x128xf32>
    %22 = arith.mulf %21, %20 : vector<8x128xf32>
    %23 = math.tanh %22 : vector<8x128xf32>
    %cst_21 = arith.constant 1.000000e+00 : f32
    %24 = vector.broadcast %cst_21 : f32 to vector<8x128xf32>
    %25 = arith.addf %23, %24 : vector<8x128xf32>
    %cst_22 = arith.constant 5.000000e-01 : f32
    %26 = vector.broadcast %cst_22 : f32 to vector<8x128xf32>
    %27 = arith.mulf %26, %25 : vector<8x128xf32>
    %28 = vector.extract_strided_slice %19 {offsets = [0, 128], sizes = [8, 128], strides = [1, 1]} : vector<8x512xf32> to vector<8x128xf32>
    %cst_23 = arith.constant 5.000000e-01 : f32
    %29 = vector.broadcast %cst_23 : f32 to vector<8x128xf32>
    %30 = arith.mulf %29, %28 : vector<8x128xf32>
    %31 = math.tanh %30 : vector<8x128xf32>
    %cst_24 = arith.constant 1.000000e+00 : f32
    %32 = vector.broadcast %cst_24 : f32 to vector<8x128xf32>
    %33 = arith.addf %31, %32 : vector<8x128xf32>
    %cst_25 = arith.constant 5.000000e-01 : f32
    %34 = vector.broadcast %cst_25 : f32 to vector<8x128xf32>
    %35 = arith.mulf %34, %33 : vector<8x128xf32>
    %36 = vector.extract_strided_slice %19 {offsets = [0, 256], sizes = [8, 128], strides = [1, 1]} : vector<8x512xf32> to vector<8x128xf32>
    %37 = math.tanh %36 : vector<8x128xf32>
    %38 = vector.extract_strided_slice %19 {offsets = [0, 384], sizes = [8, 128], strides = [1, 1]} : vector<8x512xf32> to vector<8x128xf32>
    %cst_26 = arith.constant 5.000000e-01 : f32
    %39 = vector.broadcast %cst_26 : f32 to vector<8x128xf32>
    %40 = arith.mulf %39, %38 : vector<8x128xf32>
    %41 = math.tanh %40 : vector<8x128xf32>
    %cst_27 = arith.constant 1.000000e+00 : f32
    %42 = vector.broadcast %cst_27 : f32 to vector<8x128xf32>
    %43 = arith.addf %41, %42 : vector<8x128xf32>
    %cst_28 = arith.constant 5.000000e-01 : f32
    %44 = vector.broadcast %cst_28 : f32 to vector<8x128xf32>
    %45 = arith.mulf %44, %43 : vector<8x128xf32>
    %46 = arith.mulf %35, %13 : vector<8x128xf32>
    %47 = arith.mulf %27, %37 : vector<8x128xf32>
    %48 = arith.addf %46, %47 : vector<8x128xf32>
    %49 = math.tanh %48 : vector<8x128xf32>
    %50 = arith.mulf %45, %49 : vector<8x128xf32>
    %51 = arith.index_cast %c0_i32_14 : i32 to index
    %c0_29 = arith.constant 0 : index
    %c0_30 = arith.constant 0 : index
    %52 = vector.load %arg8[%51, %c0_29, %c0_30] : memref<1x8x128xf32, #tpu.memory_space<vmem>>, vector<1x8x128xf32>
    %53 = vector.shape_cast %52 : vector<1x8x128xf32> to vector<8x128xf32>
    %54 = vector.shape_cast %50 : vector<8x128xf32> to vector<1x8x128xf32>
    tpu.vector_store %arg8[%51, %c0_29, %c0_30], %54 {strides = array<i32>} : memref<1x8x128xf32, #tpu.memory_space<vmem>>, vector<1x8x128xf32>,
    %c1_i32 = arith.constant 1 : i32
    %c0_31 = arith.constant 0 : index
    %c0_32 = arith.constant 0 : index
    %55 = vector.load %arg12[%c0_31, %c0_32] : memref<8x128xf32, #tpu.memory_space<vmem>>, vector<8x128xf32>
    tpu.vector_store %arg12[%c0_31, %c0_32], %50 {strides = array<i32>} : memref<8x128xf32, #tpu.memory_space<vmem>>, vector<8x128xf32>,
    %c0_33 = arith.constant 0 : index
    %c0_34 = arith.constant 0 : index
    %56 = vector.load %arg13[%c0_33, %c0_34] : memref<8x128xf32, #tpu.memory_space<vmem>>, vector<8x128xf32>
    tpu.vector_store %arg13[%c0_33, %c0_34], %48 {strides = array<i32>} : memref<8x128xf32, #tpu.memory_space<vmem>>, vector<8x128xf32>,
    %c0_35 = arith.constant 0 : index
    %c0_36 = arith.constant 0 : index
    %57 = vector.load %arg9[%c0_35, %c0_36] : memref<8x128xf32, #tpu.memory_space<vmem>>, vector<8x128xf32>
    tpu.vector_store %arg9[%c0_35, %c0_36], %50 {strides = array<i32>} : memref<8x128xf32, #tpu.memory_space<vmem>>, vector<8x128xf32>,
    %c0_37 = arith.constant 0 : index
    %c0_38 = arith.constant 0 : index
    %58 = vector.load %arg10[%c0_37, %c0_38] : memref<8x128xf32, #tpu.memory_space<vmem>>, vector<8x128xf32>
    tpu.vector_store %arg10[%c0_37, %c0_38], %48 {strides = array<i32>} : memref<8x128xf32, #tpu.memory_space<vmem>>, vector<8x128xf32>,
    return
  }
  func.func @transform_0(%arg0: i32, %arg1: i32) -> (i32, i32, i32) {
    %c0_i32 = arith.constant 0 : i32
    %c0_i32_0 = arith.constant 0 : i32
    return %arg1, %arg0, %c0_i32 : i32, i32, i32
  }
  func.func @transform_1(%arg0: i32, %arg1: i32) -> (i32, i32) {
    %c0_i32 = arith.constant 0 : i32
    %c0_i32_0 = arith.constant 0 : i32
    return %arg0, %c0_i32 : i32, i32
  }
  func.func @transform_2(%arg0: i32, %arg1: i32) -> (i32, i32) {
    %c0_i32 = arith.constant 0 : i32
    %c0_i32_0 = arith.constant 0 : i32
    return %arg0, %c0_i32 : i32, i32
  }
  func.func @transform_3(%arg0: i32, %arg1: i32) -> (i32, i32) {
    %c0_i32 = arith.constant 0 : i32
    %c0_i32_0 = arith.constant 0 : i32
    %c0_i32_1 = arith.constant 0 : i32
    return %c0_i32, %c0_i32_0 : i32, i32
  }
  func.func @transform_4(%arg0: i32, %arg1: i32) -> (i32, i32) {
    %c0_i32 = arith.constant 0 : i32
    %c0_i32_0 = arith.constant 0 : i32
    %c0_i32_1 = arith.constant 0 : i32
    return %c0_i32, %c0_i32_0 : i32, i32
  }
  func.func @transform_5(%arg0: i32, %arg1: i32) -> (i32, i32) {
    %c0_i32 = arith.constant 0 : i32
    %c0_i32_0 = arith.constant 0 : i32
    %c0_i32_1 = arith.constant 0 : i32
    return %c0_i32, %c0_i32_0 : i32, i32
  }
  func.func @transform_6(%arg0: i32, %arg1: i32) -> (i32, i32, i32) {
    %c0_i32 = arith.constant 0 : i32
    %c0_i32_0 = arith.constant 0 : i32
    return %arg1, %arg0, %c0_i32 : i32, i32, i32
  }
  func.func @transform_7(%arg0: i32, %arg1: i32) -> (i32, i32) {
    %c0_i32 = arith.constant 0 : i32
    %c0_i32_0 = arith.constant 0 : i32
    return %arg0, %c0_i32 : i32, i32
  }
  func.func @transform_8(%arg0: i32, %arg1: i32) -> (i32, i32) {
    %c0_i32 = arith.constant 0 : i32
    %c0_i32_0 = arith.constant 0 : i32
    return %arg0, %c0_i32 : i32, i32
  }
}

</mosaic_0001>

<llo_original>
// kernel: _lstm_forward_sequence.1
$region0: #{_lstm_forward_sequence.1}
  #allocation0 [shape = 'u32[]', space=smem, size = 0x4, offset = 0x4, fixed_abs, tag = 'smem constant byte address 0x4 - core index']
  #allocation1 [shape = 'u32[72,128]{1,0:T(1,128)}', space=vmem, size = 0x9000, scoped, tag = 'internal scratch']
  #allocation2 [shape = 'f32[1,8,512]{2,1,0:T(8,128)}', space=vmem, size = 0x4000, scoped, tag = 'scratch operand']
  #allocation3 [shape = 'f32[8,128]{1,0:T(8,128)}', space=vmem, size = 0x1000, scoped, tag = 'scratch operand']
  #allocation4 [shape = 'f32[8,128]{1,0:T(8,128)}', space=vmem, size = 0x1000, scoped, tag = 'scratch operand']
  %s0 = inlined_call_operand.vmem [shape: f32[1,8,128], index: 0, kind: input, shape index: {}]
  %s1 = inlined_call_operand.vmem [shape: f32[8,128], index: 1, kind: input, shape index: {}, may-alias: {1,7}]
  %s2 = inlined_call_operand.vmem [shape: f32[8,128], index: 2, kind: input, shape index: {}, may-alias: {2,8}]
  %s3 = inlined_call_operand.hbm [shape: f32[128,512], index: 3, kind: input, shape index: {}]
  %s4 = inlined_call_operand.hbm [shape: f32[128,512], index: 4, kind: input, shape index: {}]
  %s5 = inlined_call_operand.vmem [shape: f32[1,512], index: 5, kind: input, shape index: {}]
  %s6 = inlined_call_operand.vmem [shape: f32[1,8,128], index: 6, kind: output, shape index: {0}]
  %s7 = inlined_call_operand.vmem [shape: f32[8,128], index: 7, kind: output, shape index: {1}, may-alias: {1,7}]
  %s8 = inlined_call_operand.vmem [shape: f32[8,128], index: 8, kind: output, shape index: {2}, may-alias: {2,8}]
  %9 = xla_tuple %s6, %s7, %s8
  %s10 = sld [smem:[#allocation0]]
  $region62: #{_lstm_forward_sequence.1} parent=0
    _
  %s12 = ssub.s32 1, %s10
  %s13 = scalar_select 0, %s12, %s10
  $region1: #{_lstm_forward_sequence.1} parent=0
    #allocation5 [shape = 'u8[262144]{0}', space=vmem, size = 0x40000, scoped, tag = 'input window, operand 3, single buffered']
    #allocation6 [shape = 's32[1]{0}', space=sflag, size = 0x4, scoped, tag = 'scoped memory for _lstm_forward_sequence.1']
    #allocation7 [shape = 'u8[262144]{0}', space=vmem, size = 0x40000, scoped, tag = 'input window, operand 4, single buffered']
    #allocation8 [shape = 's32[1]{0}', space=sflag, size = 0x4, scoped, tag = 'scoped memory for _lstm_forward_sequence.1']
    %14 = vsyncpa [#allocation6], 0
    %15 = vsyncpa [#allocation8], 0
    // Predicated region
    $region2: #{_lstm_forward_sequence.1} parent=1 // pred_check
      _
    $region3: #{_lstm_forward_sequence.1} parent=1 // pred_check_branch
      %17 = sbr.rel (0) target = $region5
    $region4: #{_lstm_forward_sequence.1} parent=1 // pred_region
      _
    $region5: #{_lstm_forward_sequence.1} parent=1 // pred_fallthru
      _
    // Predicated region
    $region6: #{_lstm_forward_sequence.1} parent=1 // pred_check
      _
    $region7: #{_lstm_forward_sequence.1} parent=1 // pred_check_branch
      %19 = sbr.rel (0) target = $region9
    $region8: #{_lstm_forward_sequence.1} parent=1 // pred_region
      _
    $region9: #{_lstm_forward_sequence.1} parent=1 // pred_fallthru
      _
    // Predicated region
    $region10: #{_lstm_forward_sequence.1} parent=1 // pred_check
      _
    $region11: #{_lstm_forward_sequence.1} parent=1 // pred_check_branch
      %21 = sbr.rel (0) target = $region13
    $region12: #{_lstm_forward_sequence.1} parent=1 // pred_region
      _
    $region13: #{_lstm_forward_sequence.1} parent=1 // pred_fallthru
      _
    // Predicated region
    $region14: #{_lstm_forward_sequence.1} parent=1 // pred_check
      _
    $region15: #{_lstm_forward_sequence.1} parent=1 // pred_check_branch
      %23 = sbr.rel (0) target = $region17
    $region16: #{_lstm_forward_sequence.1} parent=1 // pred_region
      %25 = vsyncadd [#allocation6], 0
      %s26 = sshll.u32 %s3, 4
      %s27 = int_to_ptr.hbm [resolvable:$true] %s26
      %s28 = sshll.u32 [#allocation5], 4
      %s29 = int_to_ptr.vmem [resolvable:$true] %s28
      %34 = dma.hbm_to_vmem [thread:$0]  %s27, 8192, %s29, [#allocation6], 512, 512, 32
    $region17: #{_lstm_forward_sequence.1} parent=1 // pred_fallthru
      _
    // Predicated region
    $region18: #{_lstm_forward_sequence.1} parent=1 // pred_check
      _
    $region19: #{_lstm_forward_sequence.1} parent=1 // pred_check_branch
      %36 = sbr.rel (0) target = $region21
    $region20: #{_lstm_forward_sequence.1} parent=1 // pred_region
      %38 = vsyncadd [#allocation8], 0
      %s39 = sshll.u32 %s4, 4
      %s40 = int_to_ptr.hbm [resolvable:$true] %s39
      %s41 = sshll.u32 [#allocation7], 4
      %s42 = int_to_ptr.vmem [resolvable:$true] %s41
      %47 = dma.hbm_to_vmem [thread:$0]  %s40, 8192, %s42, [#allocation8], 512, 512, 32
    $region21: #{_lstm_forward_sequence.1} parent=1 // pred_fallthru
      _
    // Predicated region
    $region22: #{_lstm_forward_sequence.1} parent=1 // pred_check
      _
    $region23: #{_lstm_forward_sequence.1} parent=1 // pred_check_branch
      %49 = sbr.rel (0) target = $region25
    $region24: #{_lstm_forward_sequence.1} parent=1 // pred_region
      _
    $region25: #{_lstm_forward_sequence.1} parent=1 // pred_fallthru
      _
    // Predicated region
    $region26: #{_lstm_forward_sequence.1} parent=1 // pred_check
      _
    $region27: #{_lstm_forward_sequence.1} parent=1 // pred_check_branch
      %51 = sbr.rel (0) target = $region29
    $region28: #{_lstm_forward_sequence.1} parent=1 // pred_region
      %53 = dma.done [#allocation6], 8192
    $region29: #{_lstm_forward_sequence.1} parent=1 // pred_fallthru
      _
    // Predicated region
    $region30: #{_lstm_forward_sequence.1} parent=1 // pred_check
      _
    $region31: #{_lstm_forward_sequence.1} parent=1 // pred_check_branch
      %55 = sbr.rel (0) target = $region33
    $region32: #{_lstm_forward_sequence.1} parent=1 // pred_region
      %57 = dma.done [#allocation8], 8192
    $region33: #{_lstm_forward_sequence.1} parent=1 // pred_fallthru
      _
    %p58 = scmp.eq.s32.totalorder 0, 0
    // Predicated region
    $region34: #{_lstm_forward_sequence.1} parent=1 // pred_check
      %p59 = pneg %p58
    $region35: #{_lstm_forward_sequence.1} parent=1 // pred_check_branch
      %61 = sbr.rel (%p59) target = $region37
    $region36: #{_lstm_forward_sequence.1} parent=1 // pred_region
      %v62 = vld [vmem:[%s1] sm:$0xff]
      %63 = vst [vmem:[#allocation3] sm:$0xff] %v62
      %v64 = vld [vmem:[%s2] sm:$0xff]
      %65 = vst [vmem:[#allocation4] sm:$0xff] %v64
    $region37: #{_lstm_forward_sequence.1} parent=1 // pred_fallthru
      _
    %v66 = vld [vmem:[%s0] sm:$0xff]
    %v67 = vld [vmem:[#allocation5] sm:$0xff]
    %v68 = vld [vmem:[#allocation5 + $0x8] sm:$0xff]
    %v69 = vld [vmem:[#allocation5 + $0x10] sm:$0xff]
    %v70 = vld [vmem:[#allocation5 + $0x18] sm:$0xff]
    %v71 = vld [vmem:[#allocation5 + $0x20] sm:$0xff]
    %v72 = vld [vmem:[#allocation5 + $0x28] sm:$0xff]
    %v73 = vld [vmem:[#allocation5 + $0x30] sm:$0xff]
    %v74 = vld [vmem:[#allocation5 + $0x38] sm:$0xff]
    %v75 = vld [vmem:[#allocation5 + $0x40] sm:$0xff]
    %v76 = vld [vmem:[#allocation5 + $0x48] sm:$0xff]
    %v77 = vld [vmem:[#allocation5 + $0x50] sm:$0xff]
    %v78 = vld [vmem:[#allocation5 + $0x58] sm:$0xff]
    %v79 = vld [vmem:[#allocation5 + $0x60] sm:$0xff]
    %v80 = vld [vmem:[#allocation5 + $0x68] sm:$0xff]
    %v81 = vld [vmem:[#allocation5 + $0x70] sm:$0xff]
    %v82 = vld [vmem:[#allocation5 + $0x78] sm:$0xff]
    %v83 = vld [vmem:[#allocation5 + $0x80] sm:$0xff]
    %v84 = vld [vmem:[#allocation5 + $0x88] sm:$0xff]
    %v85 = vld [vmem:[#allocation5 + $0x90] sm:$0xff]
    %v86 = vld [vmem:[#allocation5 + $0x98] sm:$0xff]
    %v87 = vld [vmem:[#allocation5 + $0xa0] sm:$0xff]
    %v88 = vld [vmem:[#allocation5 + $0xa8] sm:$0xff]
    %v89 = vld [vmem:[#allocation5 + $0xb0] sm:$0xff]
    %v90 = vld [vmem:[#allocation5 + $0xb8] sm:$0xff]
    %v91 = vld [vmem:[#allocation5 + $0xc0] sm:$0xff]
    %v92 = vld [vmem:[#allocation5 + $0xc8] sm:$0xff]
    %v93 = vld [vmem:[#allocation5 + $0xd0] sm:$0xff]
    %v94 = vld [vmem:[#allocation5 + $0xd8] sm:$0xff]
    %v95 = vld [vmem:[#allocation5 + $0xe0] sm:$0xff]
    %v96 = vld [vmem:[#allocation5 + $0xe8] sm:$0xff]
    %v97 = vld [vmem:[#allocation5 + $0xf0] sm:$0xff]
    %v98 = vld [vmem:[#allocation5 + $0xf8] sm:$0xff]
    %v99 = vld [vmem:[#allocation5 + $0x100] sm:$0xff]
    %v100 = vld [vmem:[#allocation5 + $0x108] sm:$0xff]
    %v101 = vld [vmem:[#allocation5 + $0x110] sm:$0xff]
    %v102 = vld [vmem:[#allocation5 + $0x118] sm:$0xff]
    %v103 = vld [vmem:[#allocation5 + $0x120] sm:$0xff]
    %v104 = vld [vmem:[#allocation5 + $0x128] sm:$0xff]
    %v105 = vld [vmem:[#allocation5 + $0x130] sm:$0xff]
    %v106 = vld [vmem:[#allocation5 + $0x138] sm:$0xff]
    %v107 = vld [vmem:[#allocation5 + $0x140] sm:$0xff]
    %v108 = vld [vmem:[#allocation5 + $0x148] sm:$0xff]
    %v109 = vld [vmem:[#allocation5 + $0x150] sm:$0xff]
    %v110 = vld [vmem:[#allocation5 + $0x158] sm:$0xff]
    %v111 = vld [vmem:[#allocation5 + $0x160] sm:$0xff]
    %v112 = vld [vmem:[#allocation5 + $0x168] sm:$0xff]
    %v113 = vld [vmem:[#allocation5 + $0x170] sm:$0xff]
    %v114 = vld [vmem:[#allocation5 + $0x178] sm:$0xff]
    %v115 = vld [vmem:[#allocation5 + $0x180] sm:$0xff]
    %v116 = vld [vmem:[#allocation5 + $0x188] sm:$0xff]
    %v117 = vld [vmem:[#allocation5 + $0x190] sm:$0xff]
    %v118 = vld [vmem:[#allocation5 + $0x198] sm:$0xff]
    %v119 = vld [vmem:[#allocation5 + $0x1a0] sm:$0xff]
    %v120 = vld [vmem:[#allocation5 + $0x1a8] sm:$0xff]
    %v121 = vld [vmem:[#allocation5 + $0x1b0] sm:$0xff]
    %v122 = vld [vmem:[#allocation5 + $0x1b8] sm:$0xff]
    %v123 = vld [vmem:[#allocation5 + $0x1c0] sm:$0xff]
    %v124 = vld [vmem:[#allocation5 + $0x1c8] sm:$0xff]
    %v125 = vld [vmem:[#allocation5 + $0x1d0] sm:$0xff]
    %v126 = vld [vmem:[#allocation5 + $0x1d8] sm:$0xff]
    %v127 = vld [vmem:[#allocation5 + $0x1e0] sm:$0xff]
    %v128 = vld [vmem:[#allocation5 + $0x1e8] sm:$0xff]
    %v129 = vld [vmem:[#allocation5 + $0x1f0] sm:$0xff]
    %v130 = vld [vmem:[#allocation5 + $0x1f8] sm:$0xff]
    %v131 = vld [vmem:[%s5] sm:$0xf]
    %v133 = vperm.slane %v131, 0
    %v134 = vperm.slane %v131, 1
    %v135 = vperm.slane %v131, 2
    %v136 = vperm.slane %v131, 3
    %141 = vmatpush.msra.mxu0 %v127
    %142 = vmatpush.msra.mxu0 %v123
    %143 = vmatpush.msra.mxu0 %v119
    %144 = vmatpush.msra.mxu0 %v115
    %145 = vmatpush.msra.mxu0 %v111
    %146 = vmatpush.msra.mxu0 %v107
    %147 = vmatpush.msra.mxu0 %v103
    %148 = vmatpush.msra.mxu0 %v99
    %149 = vmatpush.msra.mxu0 %v95
    %150 = vmatpush.msra.mxu0 %v91
    %151 = vmatpush.msra.mxu0 %v87
    %152 = vmatpush.msra.mxu0 %v83
    %153 = vmatpush.msra.mxu0 %v79
    %154 = vmatpush.msra.mxu0 %v75
    %155 = vmatpush.msra.mxu0 %v71
    %156 = vmatpush.msra.mxu0 %v67
    %157 = vmatmul.f32.gmra.mxu0 %v66
    %v158 = vpop.f32.mrf.mxu0
    %v159 = vadd.f32 %v133, %v158
    %160 = vdwg.mxu0
    %161 = vmatpush.msra.mxu0 %v128
    %162 = vmatpush.msra.mxu0 %v124
    %163 = vmatpush.msra.mxu0 %v120
    %164 = vmatpush.msra.mxu0 %v116
    %165 = vmatpush.msra.mxu0 %v112
    %166 = vmatpush.msra.mxu0 %v108
    %167 = vmatpush.msra.mxu0 %v104
    %168 = vmatpush.msra.mxu0 %v100
    %169 = vmatpush.msra.mxu0 %v96
    %170 = vmatpush.msra.mxu0 %v92
    %171 = vmatpush.msra.mxu0 %v88
    %172 = vmatpush.msra.mxu0 %v84
    %173 = vmatpush.msra.mxu0 %v80
    %174 = vmatpush.msra.mxu0 %v76
    %175 = vmatpush.msra.mxu0 %v72
    %176 = vmatpush.msra.mxu0 %v68
    %177 = vmatmul.f32.gmra.mxu0 %v66
    %v178 = vpop.f32.mrf.mxu0
    %v179 = vadd.f32 %v134, %v178
    %180 = vdwg.mxu0
    %181 = vmatpush.msra.mxu0 %v129
    %182 = vmatpush.msra.mxu0 %v125
    %183 = vmatpush.msra.mxu0 %v121
    %184 = vmatpush.msra.mxu0 %v117
    %185 = vmatpush.msra.mxu0 %v113
    %186 = vmatpush.msra.mxu0 %v109
    %187 = vmatpush.msra.mxu0 %v105
    %188 = vmatpush.msra.mxu0 %v101
    %189 = vmatpush.msra.mxu0 %v97
    %190 = vmatpush.msra.mxu0 %v93
    %191 = vmatpush.msra.mxu0 %v89
    %192 = vmatpush.msra.mxu0 %v85
    %193 = vmatpush.msra.mxu0 %v81
    %194 = vmatpush.msra.mxu0 %v77
    %195 = vmatpush.msra.mxu0 %v73
    %196 = vmatpush.msra.mxu0 %v69
    %197 = vmatmul.f32.gmra.mxu0 %v66
    %v198 = vpop.f32.mrf.mxu0
    %v199 = vadd.f32 %v135, %v198
    %200 = vdwg.mxu0
    %201 = vmatpush.msra.mxu0 %v130
    %202 = vmatpush.msra.mxu0 %v126
    %203 = vmatpush.msra.mxu0 %v122
    %204 = vmatpush.msra.mxu0 %v118
    %205 = vmatpush.msra.mxu0 %v114
    %206 = vmatpush.msra.mxu0 %v110
    %207 = vmatpush.msra.mxu0 %v106
    %208 = vmatpush.msra.mxu0 %v102
    %209 = vmatpush.msra.mxu0 %v98
    %210 = vmatpush.msra.mxu0 %v94
    %211 = vmatpush.msra.mxu0 %v90
    %212 = vmatpush.msra.mxu0 %v86
    %213 = vmatpush.msra.mxu0 %v82
    %214 = vmatpush.msra.mxu0 %v78
    %215 = vmatpush.msra.mxu0 %v74
    %216 = vmatpush.msra.mxu0 %v70
    %217 = vmatmul.f32.gmra.mxu0 %v66
    %v218 = vpop.f32.mrf.mxu0
    %v219 = vadd.f32 %v136, %v218
    %220 = vdwg.mxu0
    %221 = vst [vmem:[#allocation2] sm:$0xff] %v159
    %222 = vst [vmem:[#allocation2 + $0x8] sm:$0xff] %v179
    %223 = vst [vmem:[#allocation2 + $0x10] sm:$0xff] %v199
    %224 = vst [vmem:[#allocation2 + $0x18] sm:$0xff] %v219
    %v225 = vld [vmem:[#allocation3] sm:$0xff]
    %v226 = vld [vmem:[#allocation4] sm:$0xff]
    %v227 = vld [vmem:[#allocation2] sm:$0xff]
    %v228 = vld [vmem:[#allocation2 + $0x8] sm:$0xff]
    %v229 = vld [vmem:[#allocation2 + $0x10] sm:$0xff]
    %v230 = vld [vmem:[#allocation2 + $0x18] sm:$0xff]
    %v231 = vld [vmem:[#allocation7] sm:$0xff]
    %v232 = vld [vmem:[#allocation7 + $0x8] sm:$0xff]
    %v233 = vld [vmem:[#allocation7 + $0x10] sm:$0xff]
    %v234 = vld [vmem:[#allocation7 + $0x18] sm:$0xff]
    %v235 = vld [vmem:[#allocation7 + $0x20] sm:$0xff]
    %v236 = vld [vmem:[#allocation7 + $0x28] sm:$0xff]
    %v237 = vld [vmem:[#allocation7 + $0x30] sm:$0xff]
    %v238 = vld [vmem:[#allocation7 + $0x38] sm:$0xff]
    %v239 = vld [vmem:[#allocation7 + $0x40] sm:$0xff]
    %v240 = vld [vmem:[#allocation7 + $0x48] sm:$0xff]
    %v241 = vld [vmem:[#allocation7 + $0x50] sm:$0xff]
    %v242 = vld [vmem:[#allocation7 + $0x58] sm:$0xff]
    %v243 = vld [vmem:[#allocation7 + $0x60] sm:$0xff]
    %v244 = vld [vmem:[#allocation7 + $0x68] sm:$0xff]
    %v245 = vld [vmem:[#allocation7 + $0x70] sm:$0xff]
    %v246 = vld [vmem:[#allocation7 + $0x78] sm:$0xff]
    %v247 = vld [vmem:[#allocation7 + $0x80] sm:$0xff]
    %v248 = vld [vmem:[#allocation7 + $0x88] sm:$0xff]
    %v249 = vld [vmem:[#allocation7 + $0x90] sm:$0xff]
    %v250 = vld [vmem:[#allocation7 + $0x98] sm:$0xff]
    %v251 = vld [vmem:[#allocation7 + $0xa0] sm:$0xff]
    %v252 = vld [vmem:[#allocation7 + $0xa8] sm:$0xff]
    %v253 = vld [vmem:[#allocation7 + $0xb0] sm:$0xff]
    %v254 = vld [vmem:[#allocation7 + $0xb8] sm:$0xff]
    %v255 = vld [vmem:[#allocation7 + $0xc0] sm:$0xff]
    %v256 = vld [vmem:[#allocation7 + $0xc8] sm:$0xff]
    %v257 = vld [vmem:[#allocation7 + $0xd0] sm:$0xff]
    %v258 = vld [vmem:[#allocation7 + $0xd8] sm:$0xff]
    %v259 = vld [vmem:[#allocation7 + $0xe0] sm:$0xff]
    %v260 = vld [vmem:[#allocation7 + $0xe8] sm:$0xff]
    %v261 = vld [vmem:[#allocation7 + $0xf0] sm:$0xff]
    %v262 = vld [vmem:[#allocation7 + $0xf8] sm:$0xff]
    %v263 = vld [vmem:[#allocation7 + $0x100] sm:$0xff]
    %v264 = vld [vmem:[#allocation7 + $0x108] sm:$0xff]
    %v265 = vld [vmem:[#allocation7 + $0x110] sm:$0xff]
    %v266 = vld [vmem:[#allocation7 + $0x118] sm:$0xff]
    %v267 = vld [vmem:[#allocation7 + $0x120] sm:$0xff]
    %v268 = vld [vmem:[#allocation7 + $0x128] sm:$0xff]
    %v269 = vld [vmem:[#allocation7 + $0x130] sm:$0xff]
    %v270 = vld [vmem:[#allocation7 + $0x138] sm:$0xff]
    %v271 = vld [vmem:[#allocation7 + $0x140] sm:$0xff]
    %v272 = vld [vmem:[#allocation7 + $0x148] sm:$0xff]
    %v273 = vld [vmem:[#allocation7 + $0x150] sm:$0xff]
    %v274 = vld [vmem:[#allocation7 + $0x158] sm:$0xff]
    %v275 = vld [vmem:[#allocation7 + $0x160] sm:$0xff]
    %v276 = vld [vmem:[#allocation7 + $0x168] sm:$0xff]
    %v277 = vld [vmem:[#allocation7 + $0x170] sm:$0xff]
    %v278 = vld [vmem:[#allocation7 + $0x178] sm:$0xff]
    %v279 = vld [vmem:[#allocation7 + $0x180] sm:$0xff]
    %v280 = vld [vmem:[#allocation7 + $0x188] sm:$0xff]
    %v281 = vld [vmem:[#allocation7 + $0x190] sm:$0xff]
    %v282 = vld [vmem:[#allocation7 + $0x198] sm:$0xff]
    %v283 = vld [vmem:[#allocation7 + $0x1a0] sm:$0xff]
    %v284 = vld [vmem:[#allocation7 + $0x1a8] sm:$0xff]
    %v285 = vld [vmem:[#allocation7 + $0x1b0] sm:$0xff]
    %v286 = vld [vmem:[#allocation7 + $0x1b8] sm:$0xff]
    %v287 = vld [vmem:[#allocation7 + $0x1c0] sm:$0xff]
    %v288 = vld [vmem:[#allocation7 + $0x1c8] sm:$0xff]
    %v289 = vld [vmem:[#allocation7 + $0x1d0] sm:$0xff]
    %v290 = vld [vmem:[#allocation7 + $0x1d8] sm:$0xff]
    %v291 = vld [vmem:[#allocation7 + $0x1e0] sm:$0xff]
    %v292 = vld [vmem:[#allocation7 + $0x1e8] sm:$0xff]
    %v293 = vld [vmem:[#allocation7 + $0x1f0] sm:$0xff]
    %v294 = vld [vmem:[#allocation7 + $0x1f8] sm:$0xff]
    %295 = vmatpush.msra.mxu0 %v291
    %296 = vmatpush.msra.mxu0 %v287
    %297 = vmatpush.msra.mxu0 %v283
    %298 = vmatpush.msra.mxu0 %v279
    %299 = vmatpush.msra.mxu0 %v275
    %300 = vmatpush.msra.mxu0 %v271
    %301 = vmatpush.msra.mxu0 %v267
    %302 = vmatpush.msra.mxu0 %v263
    %303 = vmatpush.msra.mxu0 %v259
    %304 = vmatpush.msra.mxu0 %v255
    %305 = vmatpush.msra.mxu0 %v251
    %306 = vmatpush.msra.mxu0 %v247
    %307 = vmatpush.msra.mxu0 %v243
    %308 = vmatpush.msra.mxu0 %v239
    %309 = vmatpush.msra.mxu0 %v235
    %310 = vmatpush.msra.mxu0 %v231
    %311 = vmatmul.f32.gmra.mxu0 %v225
    %v312 = vpop.f32.mrf.mxu0
    %v313 = vadd.f32 0.0, %v312
    %314 = vdwg.mxu0
    %315 = vmatpush.msra.mxu0 %v292
    %316 = vmatpush.msra.mxu0 %v288
    %317 = vmatpush.msra.mxu0 %v284
    %318 = vmatpush.msra.mxu0 %v280
    %319 = vmatpush.msra.mxu0 %v276
    %320 = vmatpush.msra.mxu0 %v272
    %321 = vmatpush.msra.mxu0 %v268
    %322 = vmatpush.msra.mxu0 %v264
    %323 = vmatpush.msra.mxu0 %v260
    %324 = vmatpush.msra.mxu0 %v256
    %325 = vmatpush.msra.mxu0 %v252
    %326 = vmatpush.msra.mxu0 %v248
    %327 = vmatpush.msra.mxu0 %v244
    %328 = vmatpush.msra.mxu0 %v240
    %329 = vmatpush.msra.mxu0 %v236
    %330 = vmatpush.msra.mxu0 %v232
    %331 = vmatmul.f32.gmra.mxu0 %v225
    %v332 = vpop.f32.mrf.mxu0
    %v333 = vadd.f32 0.0, %v332
    %334 = vdwg.mxu0
    %335 = vmatpush.msra.mxu0 %v293
    %336 = vmatpush.msra.mxu0 %v289
    %337 = vmatpush.msra.mxu0 %v285
    %338 = vmatpush.msra.mxu0 %v281
    %339 = vmatpush.msra.mxu0 %v277
    %340 = vmatpush.msra.mxu0 %v273
    %341 = vmatpush.msra.mxu0 %v269
    %342 = vmatpush.msra.mxu0 %v265
    %343 = vmatpush.msra.mxu0 %v261
    %344 = vmatpush.msra.mxu0 %v257
    %345 = vmatpush.msra.mxu0 %v253
    %346 = vmatpush.msra.mxu0 %v249
    %347 = vmatpush.msra.mxu0 %v245
    %348 = vmatpush.msra.mxu0 %v241
    %349 = vmatpush.msra.mxu0 %v237
    %350 = vmatpush.msra.mxu0 %v233
    %351 = vmatmul.f32.gmra.mxu0 %v225
    %v352 = vpop.f32.mrf.mxu0
    %v353 = vadd.f32 0.0, %v352
    %354 = vdwg.mxu0
    %355 = vmatpush.msra.mxu0 %v294
    %356 = vmatpush.msra.mxu0 %v290
    %357 = vmatpush.msra.mxu0 %v286
    %358 = vmatpush.msra.mxu0 %v282
    %359 = vmatpush.msra.mxu0 %v278
    %360 = vmatpush.msra.mxu0 %v274
    %361 = vmatpush.msra.mxu0 %v270
    %362 = vmatpush.msra.mxu0 %v266
    %363 = vmatpush.msra.mxu0 %v262
    %364 = vmatpush.msra.mxu0 %v258
    %365 = vmatpush.msra.mxu0 %v254
    %366 = vmatpush.msra.mxu0 %v250
    %367 = vmatpush.msra.mxu0 %v246
    %368 = vmatpush.msra.mxu0 %v242
    %369 = vmatpush.msra.mxu0 %v238
    %370 = vmatpush.msra.mxu0 %v234
    %371 = vmatmul.f32.gmra.mxu0 %v225
    %v372 = vpop.f32.mrf.mxu0
    %v373 = vadd.f32 0.0, %v372
    %374 = vdwg.mxu0
    %v375 = vadd.f32 %v227, %v313
    %v376 = vadd.f32 %v228, %v333
    %v377 = vadd.f32 %v229, %v353
    %v378 = vadd.f32 %v230, %v373
    %v379 = vmul.f32 %v375, 0.5
    %v380 = vtanh.pop %v379
    %v381 = vadd.f32 %v380, 1.0
    %v382 = vmul.f32 %v381, 0.5
    %v383 = vmul.f32 %v376, 0.5
    %v384 = vtanh.pop %v383
    %v385 = vadd.f32 %v384, 1.0
    %v386 = vmul.f32 %v385, 0.5
    %v387 = vtanh.pop %v377
    %v388 = vmul.f32 %v378, 0.5
    %v389 = vtanh.pop %v388
    %v390 = vadd.f32 %v389, 1.0
    %v391 = vmul.f32 %v390, 0.5
    %v392 = vmul.f32 %v386, %v226
    %v393 = vmul.f32 %v382, %v387
    %v394 = vadd.f32 %v392, %v393
    %v395 = vtanh.pop %v394
    %v396 = vmul.f32 %v391, %v395
    %397 = vst [vmem:[%s6] sm:$0xff] %v396
    %398 = vst [vmem:[#allocation3] sm:$0xff] %v396
    %399 = vst [vmem:[#allocation4] sm:$0xff] %v394
    %400 = vst [vmem:[%s7] sm:$0xff] %v396
    %401 = vst [vmem:[%s8] sm:$0xff] %v394
    // Predicated region
    $region38: #{_lstm_forward_sequence.1} parent=1 // pred_check
      _
    $region39: #{_lstm_forward_sequence.1} parent=1 // pred_check_branch
      %403 = sbr.rel (0) target = $region41
    $region40: #{_lstm_forward_sequence.1} parent=1 // pred_region
      _
    $region41: #{_lstm_forward_sequence.1} parent=1 // pred_fallthru
      _
    // Predicated region
    $region42: #{_lstm_forward_sequence.1} parent=1 // pred_check
      _
    $region43: #{_lstm_forward_sequence.1} parent=1 // pred_check_branch
      %405 = sbr.rel (0) target = $region45
    $region44: #{_lstm_forward_sequence.1} parent=1 // pred_region
      _
    $region45: #{_lstm_forward_sequence.1} parent=1 // pred_fallthru
      _
    // Predicated region
    $region46: #{_lstm_forward_sequence.1} parent=1 // pred_check
      _
    $region47: #{_lstm_forward_sequence.1} parent=1 // pred_check_branch
      %407 = sbr.rel (0) target = $region49
    $region48: #{_lstm_forward_sequence.1} parent=1 // pred_region
      _
    $region49: #{_lstm_forward_sequence.1} parent=1 // pred_fallthru
      _
    // Predicated region
    $region50: #{_lstm_forward_sequence.1} parent=1 // pred_check
      _
    $region51: #{_lstm_forward_sequence.1} parent=1 // pred_check_branch
      %409 = sbr.rel (0) target = $region53
    $region52: #{_lstm_forward_sequence.1} parent=1 // pred_region
      _
    $region53: #{_lstm_forward_sequence.1} parent=1 // pred_fallthru
      _
    // Predicated region
    $region54: #{_lstm_forward_sequence.1} parent=1 // pred_check
      _
    $region55: #{_lstm_forward_sequence.1} parent=1 // pred_check_branch
      %411 = sbr.rel (0) target = $region57
    $region56: #{_lstm_forward_sequence.1} parent=1 // pred_region
      _
    $region57: #{_lstm_forward_sequence.1} parent=1 // pred_fallthru
      _
    // Predicated region
    $region58: #{_lstm_forward_sequence.1} parent=1 // pred_check
      _
    $region59: #{_lstm_forward_sequence.1} parent=1 // pred_check_branch
      %413 = sbr.rel (0) target = $region61
    $region60: #{_lstm_forward_sequence.1} parent=1 // pred_region
      _
    $region61: #{_lstm_forward_sequence.1} parent=1 // pred_fallthru
      _
    %414 = vsyncpa [#allocation6], 1
    %415 = vsyncpa [#allocation8], 1

</llo_original>
